<compile_context>
chip_gen: v7x
topology: tpu7x:2x2x1
jax: 0.10.0
libtpu: 0.0.40
codegen_flags: <defaults>
</compile_context>

<pallas_src>
import functools

import numpy as np
import jax
import jax.numpy as jnp
from jax.experimental import pallas as pl
from jax.experimental.pallas import tpu as pltpu

PAD_R = 8      # sublane rows carried for x (only row 0 is real)
PAD_C = 128    # lane width
SUB_BF16 = 16  # bf16 sublane tile


def _round_up(x, m):
    return (x + m - 1) // m * m


# ----------------------------------------------------------------------------
# Minimal deterministic "genotype" mirroring the API used by Phenotype.
# ----------------------------------------------------------------------------
class _Node:
    def __init__(self, nid, layer):
        self._id, self._layer = nid, layer

    def get_id(self):
        return self._id

    def get_layer(self):
        return self._layer


class _Gene:
    def __init__(self, src, dst, weight):
        self.src, self.dst, self._w = src, dst, float(weight)

    def get_weight(self):
        return self._w


class _Layers:
    def __init__(self, inp, out):
        self._in, self._out = inp, out

    def input(self):
        return self._in

    def output(self):
        return self._out


class _Genotype:
    """Input layer 0, hidden layer 1, output layer 2; dense connections."""

    def __init__(self, n_in, n_hid, n_out, w_ih, w_ho):
        self.nodes = {}
        nid = 0
        self.input_ids, self.hidden_ids, self.output_ids = [], [], []
        for _ in range(n_in):
            self.nodes[nid] = _Node(nid, 0); self.input_ids.append(nid); nid += 1
        for _ in range(n_hid):
            self.nodes[nid] = _Node(nid, 1); self.hidden_ids.append(nid); nid += 1
        for _ in range(n_out):
            self.nodes[nid] = _Node(nid, 2); self.output_ids.append(nid); nid += 1

        self.in_edges = {i: [] for i in self.nodes}
        for h_idx, h in enumerate(self.hidden_ids):
            for i_idx, i in enumerate(self.input_ids):
                self.in_edges[h].append(_Gene(i, h, w_ih[h_idx, i_idx]))
        for o_idx, o in enumerate(self.output_ids):
            for h_idx, h in enumerate(self.hidden_ids):
                self.in_edges[o].append(_Gene(h, o, w_ho[o_idx, h_idx]))

    def topological_order(self):
        return self.input_ids + self.hidden_ids + self.output_ids

    def get_in_edges(self, nid):
        return self.in_edges[nid]

    def get_node_input_nodes(self, nid):
        return [g.src for g in self.in_edges[nid]]

    def _node_by_id(self, nid):
        return self.nodes[nid]

    def get_layers(self):
        return _Layers(0, 2)


# ----------------------------------------------------------------------------
# Pallas kernel: GB genomes per grid step, two batched MXU dots + ReLU each.
# ----------------------------------------------------------------------------
def phenotype_kernel(x_ref, w_ref, o_ref, *, k1, k2, gb):
    x = x_ref[...]                               # (GB, 8, K1)   bf16 (row 0 real)
    w1 = w_ref[:, 0:k1, :]                       # (GB, K1, 128) bf16
    w2 = w_ref[:, k1:k1 + k2, :]                 # (GB, K2, 128) bf16

    # hidden = relu(x @ w1)   (f32 accumulation on the MXU)
    h = jnp.maximum(
        jnp.einsum("gmk,gkn->gmn", x, w1, preferred_element_type=jnp.float32),
        0.0)
    # Only the first K2 hidden lanes feed w2 (the rest are exactly zero).
    h = h[:, :, :k2].astype(jnp.bfloat16)        # (GB, 8, K2)

    # out = relu(h @ w2)
    o = jnp.maximum(
        jnp.einsum("gmk,gkn->gmn", h, w2, preferred_element_type=jnp.float32),
        0.0)                                     # (GB, 8, 128) f32

    # Rows 1..7 of x are zero padding, so rows 1..7 of o are exactly zero.
    # Pack row 0 of every genome into one lane-dense (GB, 128) tile.
    o_ref[...] = jnp.concatenate([o[g, 0:1, :] for g in range(gb)], axis=0)


# ----------------------------------------------------------------------------
# Build-time packing (done ONCE per population, outside the inference path).
# ----------------------------------------------------------------------------
def pack_phenotype_weights(w1_list, w2_list, genome_block=8):
    """Pack each genome's dense (n_in,n_hid)/(n_hid,n_out) weights into a single
    (Gp, K1+K2, 128) bf16 tensor. K dims are padded only to the bf16 sublane
    tile (16), not to 128; zero padding is exact (relu(0)=0, 0-weights add 0)."""
    n_in, n_hid = w1_list[0].shape
    _, n_out = w2_list[0].shape
    g = len(w1_list)
    k1 = _round_up(n_in, SUB_BF16)
    k2 = _round_up(n_hid, SUB_BF16)
    gp = _round_up(g, genome_block)

    w = jnp.zeros((gp, k1 + k2, PAD_C), jnp.float32)
    w = w.at[:g, :n_in, :n_hid].set(jnp.stack(w1_list))
    w = w.at[:g, k1:k1 + n_hid, :n_out].set(jnp.stack(w2_list))
    meta = dict(n_in=n_in, n_hid=n_hid, n_out=n_out, k1=k1, k2=k2)
    return w.astype(jnp.bfloat16), meta


# ----------------------------------------------------------------------------
# Batched forward: one pallas_call for the whole population.
# ----------------------------------------------------------------------------
@functools.partial(
    jax.jit, static_argnames=("n_in", "n_out", "k1", "k2", "genome_block"))
def phenotype_forward_batched(x, w_packed, *, n_in, n_out, k1, k2,
                              genome_block=8):
    """x: (G, n_in) f32; w_packed: (Gp, k1+k2, 128) bf16 -> (G, n_out) f32."""
    g = x.shape[0]
    gp = w_packed.shape[0]
    gb = genome_block

    # Single jnp.pad for x: (G, n_in) -> (Gp, 8, K1), row 0 holds the input.
    x_pad = jnp.pad(x[:, None, :],
                    ((0, gp - g), (0, PAD_R - 1), (0, k1 - n_in)))
    x_pad = x_pad.astype(jnp.bfloat16)

    kernel = functools.partial(phenotype_kernel, k1=k1, k2=k2, gb=gb)

    out_pad = pl.pallas_call(
        kernel,
        out_shape=jax.ShapeDtypeStruct((gp, PAD_C), jnp.float32),
        grid=(gp // gb,),
        in_specs=[
            pl.BlockSpec((gb, PAD_R, k1), lambda i: (i, 0, 0)),
            pl.BlockSpec((gb, k1 + k2, PAD_C), lambda i: (i, 0, 0)),
        ],
        # Dense (GB, 128) f32 tile per step -> unmasked lane-dense stores.
        out_specs=pl.BlockSpec((gb, PAD_C), lambda i: (i, 0)),
        compiler_params=pltpu.CompilerParams(
            dimension_semantics=("parallel",)),   # 2 TCs on v7x split the grid
    )(x_pad, w_packed)

    return out_pad[:g, :n_out]                    # (G, n_out)


# ----------------------------------------------------------------------------
# References.
# ----------------------------------------------------------------------------
def mirror_reference(x, w_packed, *, n_in, n_out, k1, k2):
    """Exactly mirrors the kernel's bf16-storage / f32-accumulate math."""
    g = x.shape[0]
    w = w_packed.astype(jnp.float32)
    w1 = w[:g, :k1, :]
    w2 = w[:g, k1:k1 + k2, :]
    xb = jnp.zeros((g, k1), jnp.float32).at[:, :n_in].set(x)
    xb = xb.astype(jnp.bfloat16).astype(jnp.float32)
    h = jnp.maximum(jnp.einsum("gk,gkn->gn", xb, w1), 0.0)
    h = h[:, :k2].astype(jnp.bfloat16).astype(jnp.float32)
    o = jnp.maximum(jnp.einsum("gk,gkn->gn", h, w2), 0.0)
    return o[:, :n_out]


def reference_forward(genotype, x_row):
    """Host-side mirror of the PyTorch per-node loop (full-precision math)."""
    outputs = {}
    for nid in genotype.input_ids:
        outputs[nid] = float(x_row[nid])
    for nid in genotype.topological_order():
        node = genotype._node_by_id(nid)
        if node.get_layer() == genotype.get_layers().input():
            continue
        acc = 0.0
        for gene, iid in zip(genotype.get_in_edges(nid),
                             genotype.get_node_input_nodes(nid)):
            acc += gene.get_weight() * outputs[iid]
        outputs[nid] = max(acc, 0.0)
    return np.array([outputs[o] for o in genotype.output_ids], np.float32)


if __name__ == "__main__":
    G, N_IN, N_HID, N_OUT = 16, 8, 32, 4
    GB = 8                                   # genomes per grid step -> grid=(2,)

    key = jax.random.PRNGKey(0)
    k_x, k_w = jax.random.split(key)

    genotypes, w1_list, w2_list = [], [], []
    for _ in range(G):
        k_w, k_ih, k_ho = jax.random.split(k_w, 3)
        w_ih = jax.random.normal(k_ih, (N_HID, N_IN), jnp.float32) * 0.5   # hidden <- input
        w_ho = jax.random.normal(k_ho, (N_OUT, N_HID), jnp.float32) * 0.5  # output <- hidden
        genotypes.append(
            _Genotype(N_IN, N_HID, N_OUT,
                      np.asarray(jax.device_get(w_ih)),
                      np.asarray(jax.device_get(w_ho))))
        w1_list.append(jnp.transpose(w_ih))   # (N_IN,  N_HID)
        w2_list.append(jnp.transpose(w_ho))   # (N_HID, N_OUT)

    # Hoisted, build-time packing (done ONCE, not per inference).
    w_packed, meta = pack_phenotype_weights(w1_list, w2_list, genome_block=GB)

    x = jax.random.normal(k_x, (G, N_IN), jnp.float32)   # one input row per genome

    out = phenotype_forward_batched(
        x, w_packed, n_in=meta["n_in"], n_out=meta["n_out"],
        k1=meta["k1"], k2=meta["k2"], genome_block=GB)
    out = jax.block_until_ready(out)
    assert out.shape == (G, N_OUT)

    # 1) Kernel correctness: tight check against an exact mirror of its math.
    ref_mirror = mirror_reference(
        x, w_packed, n_in=meta["n_in"], n_out=meta["n_out"],
        k1=meta["k1"], k2=meta["k2"])
    assert jnp.allclose(out, ref_mirror, atol=2e-3, rtol=2e-3), (out, ref_mirror)

    # 2) Semantic fidelity vs. the PyTorch-style per-node loop (loose tolerance
    #    documents the intentional bf16 weight / hidden-activation storage).
    x_host = np.asarray(jax.device_get(x))
    out_host = np.asarray(jax.device_get(out))
    for g in range(G):
        ref = reference_forward(genotypes[g], x_host[g])
        assert np.allclose(out_host[g], ref, atol=1e-1, rtol=1e-1), (g, out_host[g], ref)

    print("KERNEL_OK")
</pallas_src>

<mosaic_0001>
module attributes {stable_mosaic.version = 11 : i64} {
  func.func @phenotype_kernel(%arg0: i32, %arg1: memref<8x8x16xbf16, #tpu.memory_space<vmem>>, %arg2: memref<8x48x128xbf16, #tpu.memory_space<vmem>>, %arg3: memref<8x128xf32, #tpu.memory_space<vmem>>) attributes {dimension_semantics = [#tpu.dimension_semantics<parallel>], iteration_bounds = array<i64: 2>, scalar_prefetch = 0 : i64, scratch_operands = 0 : i64, tpu.core_type = #tpu.core_type<tc>, window_params = [{transform_indices = @transform_0, window_bounds = array<i64: 8, 8, 16>}, {transform_indices = @transform_1, window_bounds = array<i64: 8, 48, 128>}, {transform_indices = @transform_2, window_bounds = array<i64: 8, 128>}]} {
    %c0 = arith.constant 0 : index
    %c0_0 = arith.constant 0 : index
    %c0_1 = arith.constant 0 : index
    %0 = vector.load %arg1[%c0, %c0_0, %c0_1] : memref<8x8x16xbf16, #tpu.memory_space<vmem>>, vector<8x8x16xbf16>
    %c0_2 = arith.constant 0 : index
    %c0_3 = arith.constant 0 : index
    %c0_4 = arith.constant 0 : index
    %1 = vector.load %arg2[%c0_2, %c0_3, %c0_4] : memref<8x48x128xbf16, #tpu.memory_space<vmem>>, vector<8x16x128xbf16>
    %c0_5 = arith.constant 0 : index
    %c16 = arith.constant 16 : index
    %c0_6 = arith.constant 0 : index
    %2 = vector.load %arg2[%c0_5, %c16, %c0_6] : memref<8x48x128xbf16, #tpu.memory_space<vmem>>, vector<8x32x128xbf16>
    "tpu.trace_start"() <{level = 10 : i32, message = "gmk,gkn->gmn"}> : () -> ()
    %cst = arith.constant dense<0.000000e+00> : vector<8x8x128xf32>
    %3 = tpu.matmul %0, %1, %cst {dimension_numbers = #tpu.dot_dimension_numbers<[2], [1], [1], [2], [0, 0, 0, 1, 1, 2], [0], [0]>} : vector<8x8x16xbf16>, vector<8x16x128xbf16>, vector<8x8x128xf32> -> vector<8x8x128xf32>
    "tpu.trace_stop"() : () -> ()
    %cst_7 = arith.constant 0.000000e+00 : f32
    %4 = vector.broadcast %cst_7 : f32 to vector<8x8x128xf32>
    %5 = arith.maximumf %3, %4 : vector<8x8x128xf32>
    %6 = vector.extract_strided_slice %5 {offsets = [0, 0, 0], sizes = [8, 8, 32], strides = [1, 1, 1]} : vector<8x8x128xf32> to vector<8x8x32xf32>
    %7 = arith.truncf %6 : vector<8x8x32xf32> to vector<8x8x32xbf16>
    "tpu.trace_start"() <{level = 10 : i32, message = "gmk,gkn->gmn"}> : () -> ()
    %cst_8 = arith.constant dense<0.000000e+00> : vector<8x8x128xf32>
    %8 = tpu.matmul %7, %2, %cst_8 {dimension_numbers = #tpu.dot_dimension_numbers<[2], [1], [1], [2], [0, 0, 0, 1, 1, 2], [0], [0]>} : vector<8x8x32xbf16>, vector<8x32x128xbf16>, vector<8x8x128xf32> -> vector<8x8x128xf32>
    "tpu.trace_stop"() : () -> ()
    %cst_9 = arith.constant 0.000000e+00 : f32
    %9 = vector.broadcast %cst_9 : f32 to vector<8x8x128xf32>
    %10 = arith.maximumf %8, %9 : vector<8x8x128xf32>
    %11 = vector.extract_strided_slice %10 {offsets = [0, 0, 0], sizes = [1, 1, 128], strides = [1, 1, 1]} : vector<8x8x128xf32> to vector<1x1x128xf32>
    %12 = vector.shape_cast %11 : vector<1x1x128xf32> to vector<1x128xf32>
    %13 = vector.extract_strided_slice %10 {offsets = [1, 0, 0], sizes = [1, 1, 128], strides = [1, 1, 1]} : vector<8x8x128xf32> to vector<1x1x128xf32>
    %14 = vector.shape_cast %13 : vector<1x1x128xf32> to vector<1x128xf32>
    %15 = vector.extract_strided_slice %10 {offsets = [2, 0, 0], sizes = [1, 1, 128], strides = [1, 1, 1]} : vector<8x8x128xf32> to vector<1x1x128xf32>
    %16 = vector.shape_cast %15 : vector<1x1x128xf32> to vector<1x128xf32>
    %17 = vector.extract_strided_slice %10 {offsets = [3, 0, 0], sizes = [1, 1, 128], strides = [1, 1, 1]} : vector<8x8x128xf32> to vector<1x1x128xf32>
    %18 = vector.shape_cast %17 : vector<1x1x128xf32> to vector<1x128xf32>
    %19 = vector.extract_strided_slice %10 {offsets = [4, 0, 0], sizes = [1, 1, 128], strides = [1, 1, 1]} : vector<8x8x128xf32> to vector<1x1x128xf32>
    %20 = vector.shape_cast %19 : vector<1x1x128xf32> to vector<1x128xf32>
    %21 = vector.extract_strided_slice %10 {offsets = [5, 0, 0], sizes = [1, 1, 128], strides = [1, 1, 1]} : vector<8x8x128xf32> to vector<1x1x128xf32>
    %22 = vector.shape_cast %21 : vector<1x1x128xf32> to vector<1x128xf32>
    %23 = vector.extract_strided_slice %10 {offsets = [6, 0, 0], sizes = [1, 1, 128], strides = [1, 1, 1]} : vector<8x8x128xf32> to vector<1x1x128xf32>
    %24 = vector.shape_cast %23 : vector<1x1x128xf32> to vector<1x128xf32>
    %25 = vector.extract_strided_slice %10 {offsets = [7, 0, 0], sizes = [1, 1, 128], strides = [1, 1, 1]} : vector<8x8x128xf32> to vector<1x1x128xf32>
    %26 = vector.shape_cast %25 : vector<1x1x128xf32> to vector<1x128xf32>
    %27 = tpu.concatenate %12, %14, %16, %18, %20, %22, %24, %26 in 0 : vector<1x128xf32>, vector<1x128xf32>, vector<1x128xf32>, vector<1x128xf32>, vector<1x128xf32>, vector<1x128xf32>, vector<1x128xf32>, vector<1x128xf32> -> vector<8x128xf32>
    %c0_10 = arith.constant 0 : index
    %c0_11 = arith.constant 0 : index
    %28 = vector.load %arg3[%c0_10, %c0_11] : memref<8x128xf32, #tpu.memory_space<vmem>>, vector<8x128xf32>
    tpu.vector_store %arg3[%c0_10, %c0_11], %27 {strides = array<i32>} : memref<8x128xf32, #tpu.memory_space<vmem>>, vector<8x128xf32>,
    return
  }
  func.func @transform_0(%arg0: i32) -> (i32, i32, i32) {
    %c0_i32 = arith.constant 0 : i32
    %c0_i32_0 = arith.constant 0 : i32
    %c0_i32_1 = arith.constant 0 : i32
    return %arg0, %c0_i32, %c0_i32_0 : i32, i32, i32
  }
  func.func @transform_1(%arg0: i32) -> (i32, i32, i32) {
    %c0_i32 = arith.constant 0 : i32
    %c0_i32_0 = arith.constant 0 : i32
    %c0_i32_1 = arith.constant 0 : i32
    return %arg0, %c0_i32, %c0_i32_0 : i32, i32, i32
  }
  func.func @transform_2(%arg0: i32) -> (i32, i32) {
    %c0_i32 = arith.constant 0 : i32
    %c0_i32_0 = arith.constant 0 : i32
    return %arg0, %c0_i32 : i32, i32
  }
}

</mosaic_0001>

<llo_original>
// kernel: phenotype_forward_batched.1
$region0: #{phenotype_forward_batched.1}
  #allocation0 [shape = 'u32[]', space=smem, size = 0x4, offset = 0x4, fixed_abs, tag = 'smem constant byte address 0x4 - core index']
  #allocation1 [shape = 'u32[144,128]{1,0:T(1,128)}', space=vmem, size = 0x12000, scoped, tag = 'internal scratch']
  %s0 = inlined_call_operand.vmem [shape: bf16[16,8,16], index: 0, kind: input, shape index: {}]
  %s1 = inlined_call_operand.hbm [shape: bf16[16,48,128], index: 1, kind: input, shape index: {}]
  %s2 = inlined_call_operand.vmem [shape: f32[16,128], index: 2, kind: output, shape index: {}]
  %s3 = sld [smem:[#allocation0]]
  $region45: #{phenotype_forward_batched.1} parent=0
    _
  %s5 = ssub.s32 1, %s3
  %s6 = scalar_select 0, %s5, %s3
  $region1: #{phenotype_forward_batched.1} parent=0
    #allocation2 [shape = 'u8[196608]{0}', space=vmem, size = 0x30000, scoped, tag = 'input window, operand 1']
    #allocation3 [shape = 's32[2]{0}', space=sflag, size = 0x8, scoped, tag = 'scoped memory for phenotype_forward_batched.1']
    %7 = vsyncpa [#allocation3], 0
    %s8 = scalar_lea.sflag [#allocation3], 1
    %9 = vsyncpa %s8, 0
    loop: start=0, step=1, limit=4
    $region2: #{phenotype_forward_batched.1} parent=1 // loop_pre_header
      _
    $region3: #{phenotype_forward_batched.1} parent=1 // loop_header
      %s11 = sphi 0, %s15
      %p12 = scmp.ge.s32.totalorder %s11, 4
      %s21 = sphi 0, %s23
      %s24 = sphi 0, %s21
      %s25 = sphi 0, %s24
      %s41 = sphi 0, %s25
      %s47 = sphi 0, %s49
      %s50 = sphi 0, %s47
      %s51 = sphi 0, %s50
      %s67 = sphi 0, %s51
      %s73 = sphi 0, %s75
      %s76 = sphi 0, %s73
      %s77 = sphi 0, %s76
      %s93 = sphi 0, %s77
    $region4: #{phenotype_forward_batched.1} parent=1 // loop_header_branch
      %14 = sbr.rel (%p12) target = $region8
    $region5: #{phenotype_forward_batched.1} parent=1 // loop_body
      %s16 = ssub.s32 %s11, 1
      %s17 = ssub.s32 %s11, 2
      %s18 = sadd.s32 %s11, 1
      %s19 = ssub.s32 %s11, %s18
      %p20 = scmp.eq.s32.totalorder %s19, 0
      %s22 = sadd.s32 %s21, 1
      %s23 = scalar_select %p20, %s21, %s22
      %p26 = pneg %p20
      %p27 = scmp.eq.s32.totalorder %s11, 1
      %p28 = por %p26, %p27
      %p29 = scmp.ne.s32.totalorder %s21, %s24
      %p30 = scmp.eq.s32.totalorder %s11, 0
      %p31 = por %p29, %p30
      %p32 = scmp.ne.s32.totalorder %s21, %s24
      %p33 = scmp.eq.s32.totalorder %s16, 1
      %p34 = por %p32, %p33
      %p35 = scmp.ne.s32.totalorder %s24, %s25
      %p36 = scmp.eq.s32.totalorder %s16, 0
      %p37 = por %p35, %p36
      %p38 = scmp.ne.s32.totalorder %s24, %s25
      %p39 = scmp.eq.s32.totalorder %s17, 1
      %p40 = por %p38, %p39
      %p42 = scmp.ne.s32.totalorder %s25, %s41
      %p43 = scmp.eq.s32.totalorder %s17, 0
      %p44 = por %p42, %p43
      %s45 = ssub.s32 %s11, %s18
      %p46 = scmp.eq.s32.totalorder %s45, 0
      %s48 = sadd.s32 %s47, 1
      %s49 = scalar_select %p46, %s47, %s48
      %p52 = pneg %p46
      %p53 = scmp.eq.s32.totalorder %s11, 1
      %p54 = por %p52, %p53
      %p55 = scmp.ne.s32.totalorder %s47, %s50
      %p56 = scmp.eq.s32.totalorder %s11, 0
      %p57 = por %p55, %p56
      %p58 = scmp.ne.s32.totalorder %s47, %s50
      %p59 = scmp.eq.s32.totalorder %s16, 1
      %p60 = por %p58, %p59
      %p61 = scmp.ne.s32.totalorder %s50, %s51
      %p62 = scmp.eq.s32.totalorder %s16, 0
      %p63 = por %p61, %p62
      %p64 = scmp.ne.s32.totalorder %s50, %s51
      %p65 = scmp.eq.s32.totalorder %s17, 1
      %p66 = por %p64, %p65
      %p68 = scmp.ne.s32.totalorder %s51, %s67
      %p69 = scmp.eq.s32.totalorder %s17, 0
      %p70 = por %p68, %p69
      %s71 = ssub.s32 %s11, %s18
      %p72 = scmp.eq.s32.totalorder %s71, 0
      %s74 = sadd.s32 %s73, 1
      %s75 = scalar_select %p72, %s73, %s74
      %p78 = pneg %p72
      %p79 = scmp.eq.s32.totalorder %s11, 1
      %p80 = por %p78, %p79
      %p81 = scmp.ne.s32.totalorder %s73, %s76
      %p82 = scmp.eq.s32.totalorder %s11, 0
      %p83 = por %p81, %p82
      %p84 = scmp.ne.s32.totalorder %s73, %s76
      %p85 = scmp.eq.s32.totalorder %s16, 1
      %p86 = por %p84, %p85
      %p87 = scmp.ne.s32.totalorder %s76, %s77
      %p88 = scmp.eq.s32.totalorder %s16, 0
      %p89 = por %p87, %p88
      %p90 = scmp.ne.s32.totalorder %s76, %s77
      %p91 = scmp.eq.s32.totalorder %s17, 1
      %p92 = por %p90, %p91
      %p94 = scmp.ne.s32.totalorder %s77, %s93
      %p95 = scmp.eq.s32.totalorder %s17, 0
      %p96 = por %p94, %p95
      %p97 = scmp.le.s32.totalorder 1, %s11
      %p98 = scmp.lt.s32.totalorder %s11, 3
      %p99 = pnand %p97, %p98
      %p100 = pneg %p99
      // Predicated region
      $region9: #{phenotype_forward_batched.1} parent=5 // pred_check
        _
      $region10: #{phenotype_forward_batched.1} parent=5 // pred_check_branch
        %102 = sbr.rel (%p99) target = $region12
      $region11: #{phenotype_forward_batched.1} parent=5 // pred_region
        %s103 = ssub.s32 %s11, 1
      $region12: #{phenotype_forward_batched.1} parent=5 // pred_fallthru
        _
      %p104 = scmp.lt.s32.totalorder %s11, 2
      // Predicated region
      $region13: #{phenotype_forward_batched.1} parent=5 // pred_check
        %p105 = pneg %p104
      $region14: #{phenotype_forward_batched.1} parent=5 // pred_check_branch
        %107 = sbr.rel (%p105) target = $region16
      $region15: #{phenotype_forward_batched.1} parent=5 // pred_region
        // Predicated region
        $region17: #{phenotype_forward_batched.1} parent=15 // pred_check
          %p108 = pneg %p31
        $region18: #{phenotype_forward_batched.1} parent=15 // pred_check_branch
          %110 = sbr.rel (%p108) target = $region20
        $region19: #{phenotype_forward_batched.1} parent=15 // pred_region
          %s111 = smul.u32 8, %s11
          %p112 = scmp.lt.s32.totalorder %s111, 15
          %s113 = scalar_select %p112, %s111, 15
          %s114 = smul.addr %s113, 4
          %s115 = scalar_lea.vmem %s0, %s114
          %s116 = smul.u32 8, %s11
        $region20: #{phenotype_forward_batched.1} parent=15 // pred_fallthru
          _
        // Predicated region
        $region21: #{phenotype_forward_batched.1} parent=15 // pred_check
          %p117 = pneg %p57
        $region22: #{phenotype_forward_batched.1} parent=15 // pred_check_branch
          %119 = sbr.rel (%p117) target = $region24
        $region23: #{phenotype_forward_batched.1} parent=15 // pred_region
          %s120 = sand.u32 %s47, 1
          %s121 = scalar_lea.sflag [#allocation3], %s120
          %s122 = sand.u32 %s47, 1
          %s123 = smul.addr %s122, 192
          %s124 = scalar_lea.vmem [#allocation2], %s123
          %s125 = smul.u32 8, %s11
          %s127 = ssub.s32 3072, 3072
          %128 = vsyncadd %s121, %s127
          %s129 = smul.addr %s125, 6
          %s130 = smul.addr %s129, 64
          %s131 = scalar_lea.hbm %s1, %s130
          %s132 = sshll.u32 %s124, 4
          %s133 = int_to_ptr.vmem [resolvable:$true] %s132
          %138 = dma.hbm_to_vmem [thread:$0]  %s131, 3072, %s133, %s121, 64, 64, 4
        $region24: #{phenotype_forward_batched.1} parent=15 // pred_fallthru
          _
      $region16: #{phenotype_forward_batched.1} parent=5 // pred_fallthru
        _
      %p139 = scmp.le.s32.totalorder 1, %s11
      %p140 = scmp.lt.s32.totalorder %s11, 3
      %p141 = pnand %p139, %p140
      %p142 = pneg %p141
      // Predicated region
      $region25: #{phenotype_forward_batched.1} parent=5 // pred_check
        _
      $region26: #{phenotype_forward_batched.1} parent=5 // pred_check_branch
        %144 = sbr.rel (%p141) target = $region28
      $region27: #{phenotype_forward_batched.1} parent=5 // pred_region
        %s145 = ssub.s32 %s11, 1
        %s146 = sand.u32 %s50, 1
        %s147 = scalar_lea.sflag [#allocation3], %s146
        %s148 = sand.u32 %s50, 1
        %s149 = smul.addr %s148, 192
        %s150 = scalar_lea.vmem [#allocation2], %s149
        // Predicated region
        $region29: #{phenotype_forward_batched.1} parent=27 // pred_check
          %p151 = pneg %p63
        $region30: #{phenotype_forward_batched.1} parent=27 // pred_check_branch
          %153 = sbr.rel (%p151) target = $region32
        $region31: #{phenotype_forward_batched.1} parent=27 // pred_region
          %154 = dma.done %s147, 3072
        $region32: #{phenotype_forward_batched.1} parent=27 // pred_fallthru
          _
        %s155 = smul.u32 8, %s16
        %p156 = scmp.lt.s32.totalorder %s155, 15
        %s157 = scalar_select %p156, %s155, 15
        %s158 = smul.addr %s157, 4
        %s159 = scalar_lea.vmem %s0, %s158
        %p160 = pneg %p37
        %p161 = pneg %p34
        %s162 = sand.u32 %s50, 1
        %s163 = scalar_lea.sflag [#allocation3], %s162
        %s164 = sand.u32 %s50, 1
        %s165 = smul.addr %s164, 192
        %s166 = scalar_lea.vmem [#allocation2], %s165
        %p167 = pneg %p63
        %p168 = pneg %p60
        %p169 = pneg %p89
        %p170 = pneg %p86
        %p171 = scmp.lt.s32.totalorder %s16, 1
        %s172 = scalar_select %p171, %s16, 1
        %s173 = smul.addr %s172, 8
        %s174 = scalar_lea.vmem %s2, %s173
        %s175 = smul.u32 8, %s16
        %p176 = scmp.lt.s32.totalorder %s175, 15
        %s177 = scalar_select %p176, %s175, 15
        %s178 = smul.addr %s177, 4
        %s179 = scalar_lea.vmem %s0, %s178
        %s180 = smul.u32 8, %s16
        %s181 = smul.u32 8, %s16
        %p182 = scmp.lt.s32.totalorder %s16, 1
        %s183 = scalar_select %p182, %s16, 1
        %s184 = smul.addr %s183, 8
        %s185 = scalar_lea.vmem %s2, %s184
        %v187 = vld [vmem:[%s179] sm:$0xf]
        %v188 = vld [vmem:[%s179 + $0x4] sm:$0xf]
        %v189 = vld [vmem:[%s179 + $0x8] sm:$0xf]
        %v190 = vld [vmem:[%s179 + $0xc] sm:$0xf]
        %v191 = vld [vmem:[%s179 + $0x10] sm:$0xf]
        %v192 = vld [vmem:[%s179 + $0x14] sm:$0xf]
        %v193 = vld [vmem:[%s179 + $0x18] sm:$0xf]
        %v194 = vld [vmem:[%s179 + $0x1c] sm:$0xf]
        %v195 = vld [vmem:[%s150] sm:$0xf]
        %v196 = vld [vmem:[%s150 + $0x4] sm:$0xf]
        %v197 = vld [vmem:[%s150 + $0x18] sm:$0xf]
        %v198 = vld [vmem:[%s150 + $0x1c] sm:$0xf]
        %v199 = vld [vmem:[%s150 + $0x30] sm:$0xf]
        %v200 = vld [vmem:[%s150 + $0x34] sm:$0xf]
        %v201 = vld [vmem:[%s150 + $0x48] sm:$0xf]
        %v202 = vld [vmem:[%s150 + $0x4c] sm:$0xf]
        %v203 = vld [vmem:[%s150 + $0x60] sm:$0xf]
        %v204 = vld [vmem:[%s150 + $0x64] sm:$0xf]
        %v205 = vld [vmem:[%s150 + $0x78] sm:$0xf]
        %v206 = vld [vmem:[%s150 + $0x7c] sm:$0xf]
        %v207 = vld [vmem:[%s150 + $0x90] sm:$0xf]
        %v208 = vld [vmem:[%s150 + $0x94] sm:$0xf]
        %v209 = vld [vmem:[%s150 + $0xa8] sm:$0xf]
        %v210 = vld [vmem:[%s150 + $0xac] sm:$0xf]
        %v211 = vld [vmem:[%s150 + $0x8] sm:$0xf]
        %v212 = vld [vmem:[%s150 + $0xc] sm:$0xf]
        %v213 = vld [vmem:[%s150 + $0x10] sm:$0xf]
        %v214 = vld [vmem:[%s150 + $0x14] sm:$0xf]
        %v215 = vld [vmem:[%s150 + $0x20] sm:$0xf]
        %v216 = vld [vmem:[%s150 + $0x24] sm:$0xf]
        %v217 = vld [vmem:[%s150 + $0x28] sm:$0xf]
        %v218 = vld [vmem:[%s150 + $0x2c] sm:$0xf]
        %v219 = vld [vmem:[%s150 + $0x38] sm:$0xf]
        %v220 = vld [vmem:[%s150 + $0x3c] sm:$0xf]
        %v221 = vld [vmem:[%s150 + $0x40] sm:$0xf]
        %v222 = vld [vmem:[%s150 + $0x44] sm:$0xf]
        %v223 = vld [vmem:[%s150 + $0x50] sm:$0xf]
        %v224 = vld [vmem:[%s150 + $0x54] sm:$0xf]
        %v225 = vld [vmem:[%s150 + $0x58] sm:$0xf]
        %v226 = vld [vmem:[%s150 + $0x5c] sm:$0xf]
        %v227 = vld [vmem:[%s150 + $0x68] sm:$0xf]
        %v228 = vld [vmem:[%s150 + $0x6c] sm:$0xf]
        %v229 = vld [vmem:[%s150 + $0x70] sm:$0xf]
        %v230 = vld [vmem:[%s150 + $0x74] sm:$0xf]
        %v231 = vld [vmem:[%s150 + $0x80] sm:$0xf]
        %v232 = vld [vmem:[%s150 + $0x84] sm:$0xf]
        %v233 = vld [vmem:[%s150 + $0x88] sm:$0xf]
        %v234 = vld [vmem:[%s150 + $0x8c] sm:$0xf]
        %v235 = vld [vmem:[%s150 + $0x98] sm:$0xf]
        %v236 = vld [vmem:[%s150 + $0x9c] sm:$0xf]
        %v237 = vld [vmem:[%s150 + $0xa0] sm:$0xf]
        %v238 = vld [vmem:[%s150 + $0xa4] sm:$0xf]
        %v239 = vld [vmem:[%s150 + $0xb0] sm:$0xf]
        %v240 = vld [vmem:[%s150 + $0xb4] sm:$0xf]
        %v241 = vld [vmem:[%s150 + $0xb8] sm:$0xf]
        %v242 = vld [vmem:[%s150 + $0xbc] sm:$0xf]
        %v245 = vunpack.c.l.b16 %v195
        %v246 = vunpack.c.l.b16 %v196
        %v247 = vpack.c.b16 %v246, %v245
        %vm249 = vcmask 130048
        %v251 = vsel %vm249, %v187, 0
        %253 = vmatprep.subr.bf16.mxu0 0
        %254 = vmatpush1.bf16.msra.mxu0 %v247
        %255 = vmatprep.subr.bf16.mxu0 0
        %256 = vmatpush1.bf16.msra.mxu0 0
        %257 = vmatprep.subr.bf16.mxu0 0
        %258 = vmatpush1.bf16.msra.mxu0 0
        %259 = vmatprep.subr.bf16.mxu0 0
        %260 = vmatpush1.bf16.msra.mxu0 0
        %261 = vmatprep.subr.bf16.mxu0 0
        %262 = vmatpush1.bf16.msra.mxu0 0
        %263 = vmatprep.subr.bf16.mxu0 0
        %264 = vmatpush1.bf16.msra.mxu0 0
        %265 = vmatprep.subr.bf16.mxu0 0
        %266 = vmatpush1.bf16.msra.mxu0 0
        %267 = vmatprep.subr.bf16.mxu0 0
        %268 = vmatpush1.bf16.msra.mxu0 0
        %269 = vmatprep.subr.bf16.mxu0 0
        %270 = vmatpush1.bf16.msra.mxu0 0
        %271 = vmatprep.subr.bf16.mxu0 0
        %272 = vmatpush1.bf16.msra.mxu0 0
        %273 = vmatprep.subr.bf16.mxu0 0
        %274 = vmatpush1.bf16.msra.mxu0 0
        %275 = vmatprep.subr.bf16.mxu0 0
        %276 = vmatpush1.bf16.msra.mxu0 0
        %277 = vmatprep.subr.bf16.mxu0 0
        %278 = vmatpush1.bf16.msra.mxu0 0
        %279 = vmatprep.subr.bf16.mxu0 0
        %280 = vmatpush1.bf16.msra.mxu0 0
        %281 = vmatprep.subr.bf16.mxu0 0
        %282 = vmatpush1.bf16.msra.mxu0 0
        %283 = vmatprep.subr.bf16.mxu0 0
        %284 = vmatpush1.bf16.msra.mxu0 0
        %285 = vmatprep.mubr.bf16.mxu0 0
        %286 = vmatmul.mubr.bf16.gmra.mrb[0].mxu0 %v251
        %v287 = vpop.f32.mrb[0].mxu0
        %v288 = vadd.f32 0.0, %v287
        %v289 = vpop.f32.mrb[0].mxu0
        %v290 = vpop.f32.mrb[0].mxu0
        %v291 = vpop.f32.mrb[0].mxu0
        %292 = vdwg.mxu0
        %v295 = vunpack.c.l.b16 %v197
        %v296 = vunpack.c.l.b16 %v198
        %v297 = vpack.c.b16 %v296, %v295
        %v300 = vsel %vm249, %v188, 0
        %302 = vmatprep.subr.bf16.mxu0 0
        %303 = vmatpush1.bf16.msra.mxu0 %v297
        %304 = vmatprep.subr.bf16.mxu0 0
        %305 = vmatpush1.bf16.msra.mxu0 0
        %306 = vmatprep.subr.bf16.mxu0 0
        %307 = vmatpush1.bf16.msra.mxu0 0
        %308 = vmatprep.subr.bf16.mxu0 0
        %309 = vmatpush1.bf16.msra.mxu0 0
        %310 = vmatprep.subr.bf16.mxu0 0
        %311 = vmatpush1.bf16.msra.mxu0 0
        %312 = vmatprep.subr.bf16.mxu0 0
        %313 = vmatpush1.bf16.msra.mxu0 0
        %314 = vmatprep.subr.bf16.mxu0 0
        %315 = vmatpush1.bf16.msra.mxu0 0
        %316 = vmatprep.subr.bf16.mxu0 0
        %317 = vmatpush1.bf16.msra.mxu0 0
        %318 = vmatprep.subr.bf16.mxu0 0
        %319 = vmatpush1.bf16.msra.mxu0 0
        %320 = vmatprep.subr.bf16.mxu0 0
        %321 = vmatpush1.bf16.msra.mxu0 0
        %322 = vmatprep.subr.bf16.mxu0 0
        %323 = vmatpush1.bf16.msra.mxu0 0
        %324 = vmatprep.subr.bf16.mxu0 0
        %325 = vmatpush1.bf16.msra.mxu0 0
        %326 = vmatprep.subr.bf16.mxu0 0
        %327 = vmatpush1.bf16.msra.mxu0 0
        %328 = vmatprep.subr.bf16.mxu0 0
        %329 = vmatpush1.bf16.msra.mxu0 0
        %330 = vmatprep.subr.bf16.mxu0 0
        %331 = vmatpush1.bf16.msra.mxu0 0
        %332 = vmatprep.subr.bf16.mxu0 0
        %333 = vmatpush1.bf16.msra.mxu0 0
        %334 = vmatprep.mubr.bf16.mxu0 0
        %335 = vmatmul.mubr.bf16.gmra.mrb[0].mxu0 %v300
        %v336 = vpop.f32.mrb[0].mxu0
        %v337 = vadd.f32 0.0, %v336
        %v338 = vpop.f32.mrb[0].mxu0
        %v339 = vpop.f32.mrb[0].mxu0
        %v340 = vpop.f32.mrb[0].mxu0
        %341 = vdwg.mxu0
        %v344 = vunpack.c.l.b16 %v199
        %v345 = vunpack.c.l.b16 %v200
        %v346 = vpack.c.b16 %v345, %v344
        %v349 = vsel %vm249, %v189, 0
        %351 = vmatprep.subr.bf16.mxu0 0
        %352 = vmatpush1.bf16.msra.mxu0 %v346
        %353 = vmatprep.subr.bf16.mxu0 0
        %354 = vmatpush1.bf16.msra.mxu0 0
        %355 = vmatprep.subr.bf16.mxu0 0
        %356 = vmatpush1.bf16.msra.mxu0 0
        %357 = vmatprep.subr.bf16.mxu0 0
        %358 = vmatpush1.bf16.msra.mxu0 0
        %359 = vmatprep.subr.bf16.mxu0 0
        %360 = vmatpush1.bf16.msra.mxu0 0
        %361 = vmatprep.subr.bf16.mxu0 0
        %362 = vmatpush1.bf16.msra.mxu0 0
        %363 = vmatprep.subr.bf16.mxu0 0
        %364 = vmatpush1.bf16.msra.mxu0 0
        %365 = vmatprep.subr.bf16.mxu0 0
        %366 = vmatpush1.bf16.msra.mxu0 0
        %367 = vmatprep.subr.bf16.mxu0 0
        %368 = vmatpush1.bf16.msra.mxu0 0
        %369 = vmatprep.subr.bf16.mxu0 0
        %370 = vmatpush1.bf16.msra.mxu0 0
        %371 = vmatprep.subr.bf16.mxu0 0
        %372 = vmatpush1.bf16.msra.mxu0 0
        %373 = vmatprep.subr.bf16.mxu0 0
        %374 = vmatpush1.bf16.msra.mxu0 0
        %375 = vmatprep.subr.bf16.mxu0 0
        %376 = vmatpush1.bf16.msra.mxu0 0
        %377 = vmatprep.subr.bf16.mxu0 0
        %378 = vmatpush1.bf16.msra.mxu0 0
        %379 = vmatprep.subr.bf16.mxu0 0
        %380 = vmatpush1.bf16.msra.mxu0 0
        %381 = vmatprep.subr.bf16.mxu0 0
        %382 = vmatpush1.bf16.msra.mxu0 0
        %383 = vmatprep.mubr.bf16.mxu0 0
        %384 = vmatmul.mubr.bf16.gmra.mrb[0].mxu0 %v349
        %v385 = vpop.f32.mrb[0].mxu0
        %v386 = vadd.f32 0.0, %v385
        %v387 = vpop.f32.mrb[0].mxu0
        %v388 = vpop.f32.mrb[0].mxu0
        %v389 = vpop.f32.mrb[0].mxu0
        %390 = vdwg.mxu0
        %v393 = vunpack.c.l.b16 %v201
        %v394 = vunpack.c.l.b16 %v202
        %v395 = vpack.c.b16 %v394, %v393
        %v398 = vsel %vm249, %v190, 0
        %400 = vmatprep.subr.bf16.mxu0 0
        %401 = vmatpush1.bf16.msra.mxu0 %v395
        %402 = vmatprep.subr.bf16.mxu0 0
        %403 = vmatpush1.bf16.msra.mxu0 0
        %404 = vmatprep.subr.bf16.mxu0 0
        %405 = vmatpush1.bf16.msra.mxu0 0
        %406 = vmatprep.subr.bf16.mxu0 0
        %407 = vmatpush1.bf16.msra.mxu0 0
        %408 = vmatprep.subr.bf16.mxu0 0
        %409 = vmatpush1.bf16.msra.mxu0 0
        %410 = vmatprep.subr.bf16.mxu0 0
        %411 = vmatpush1.bf16.msra.mxu0 0
        %412 = vmatprep.subr.bf16.mxu0 0
        %413 = vmatpush1.bf16.msra.mxu0 0
        %414 = vmatprep.subr.bf16.mxu0 0
        %415 = vmatpush1.bf16.msra.mxu0 0
        %416 = vmatprep.subr.bf16.mxu0 0
        %417 = vmatpush1.bf16.msra.mxu0 0
        %418 = vmatprep.subr.bf16.mxu0 0
        %419 = vmatpush1.bf16.msra.mxu0 0
        %420 = vmatprep.subr.bf16.mxu0 0
        %421 = vmatpush1.bf16.msra.mxu0 0
        %422 = vmatprep.subr.bf16.mxu0 0
        %423 = vmatpush1.bf16.msra.mxu0 0
        %424 = vmatprep.subr.bf16.mxu0 0
        %425 = vmatpush1.bf16.msra.mxu0 0
        %426 = vmatprep.subr.bf16.mxu0 0
        %427 = vmatpush1.bf16.msra.mxu0 0
        %428 = vmatprep.subr.bf16.mxu0 0
        %429 = vmatpush1.bf16.msra.mxu0 0
        %430 = vmatprep.subr.bf16.mxu0 0
        %431 = vmatpush1.bf16.msra.mxu0 0
        %432 = vmatprep.mubr.bf16.mxu0 0
        %433 = vmatmul.mubr.bf16.gmra.mrb[0].mxu0 %v398
        %v434 = vpop.f32.mrb[0].mxu0
        %v435 = vadd.f32 0.0, %v434
        %v436 = vpop.f32.mrb[0].mxu0
        %v437 = vpop.f32.mrb[0].mxu0
        %v438 = vpop.f32.mrb[0].mxu0
        %439 = vdwg.mxu0
        %v442 = vunpack.c.l.b16 %v203
        %v443 = vunpack.c.l.b16 %v204
        %v444 = vpack.c.b16 %v443, %v442
        %v447 = vsel %vm249, %v191, 0
        %449 = vmatprep.subr.bf16.mxu0 0
        %450 = vmatpush1.bf16.msra.mxu0 %v444
        %451 = vmatprep.subr.bf16.mxu0 0
        %452 = vmatpush1.bf16.msra.mxu0 0
        %453 = vmatprep.subr.bf16.mxu0 0
        %454 = vmatpush1.bf16.msra.mxu0 0
        %455 = vmatprep.subr.bf16.mxu0 0
        %456 = vmatpush1.bf16.msra.mxu0 0
        %457 = vmatprep.subr.bf16.mxu0 0
        %458 = vmatpush1.bf16.msra.mxu0 0
        %459 = vmatprep.subr.bf16.mxu0 0
        %460 = vmatpush1.bf16.msra.mxu0 0
        %461 = vmatprep.subr.bf16.mxu0 0
        %462 = vmatpush1.bf16.msra.mxu0 0
        %463 = vmatprep.subr.bf16.mxu0 0
        %464 = vmatpush1.bf16.msra.mxu0 0
        %465 = vmatprep.subr.bf16.mxu0 0
        %466 = vmatpush1.bf16.msra.mxu0 0
        %467 = vmatprep.subr.bf16.mxu0 0
        %468 = vmatpush1.bf16.msra.mxu0 0
        %469 = vmatprep.subr.bf16.mxu0 0
        %470 = vmatpush1.bf16.msra.mxu0 0
        %471 = vmatprep.subr.bf16.mxu0 0
        %472 = vmatpush1.bf16.msra.mxu0 0
        %473 = vmatprep.subr.bf16.mxu0 0
        %474 = vmatpush1.bf16.msra.mxu0 0
        %475 = vmatprep.subr.bf16.mxu0 0
        %476 = vmatpush1.bf16.msra.mxu0 0
        %477 = vmatprep.subr.bf16.mxu0 0
        %478 = vmatpush1.bf16.msra.mxu0 0
        %479 = vmatprep.subr.bf16.mxu0 0
        %480 = vmatpush1.bf16.msra.mxu0 0
        %481 = vmatprep.mubr.bf16.mxu0 0
        %482 = vmatmul.mubr.bf16.gmra.mrb[0].mxu0 %v447
        %v483 = vpop.f32.mrb[0].mxu0
        %v484 = vadd.f32 0.0, %v483
        %v485 = vpop.f32.mrb[0].mxu0
        %v486 = vpop.f32.mrb[0].mxu0
        %v487 = vpop.f32.mrb[0].mxu0
        %488 = vdwg.mxu0
        %v491 = vunpack.c.l.b16 %v205
        %v492 = vunpack.c.l.b16 %v206
        %v493 = vpack.c.b16 %v492, %v491
        %v496 = vsel %vm249, %v192, 0
        %498 = vmatprep.subr.bf16.mxu0 0
        %499 = vmatpush1.bf16.msra.mxu0 %v493
        %500 = vmatprep.subr.bf16.mxu0 0
        %501 = vmatpush1.bf16.msra.mxu0 0
        %502 = vmatprep.subr.bf16.mxu0 0
        %503 = vmatpush1.bf16.msra.mxu0 0
        %504 = vmatprep.subr.bf16.mxu0 0
        %505 = vmatpush1.bf16.msra.mxu0 0
        %506 = vmatprep.subr.bf16.mxu0 0
        %507 = vmatpush1.bf16.msra.mxu0 0
        %508 = vmatprep.subr.bf16.mxu0 0
        %509 = vmatpush1.bf16.msra.mxu0 0
        %510 = vmatprep.subr.bf16.mxu0 0
        %511 = vmatpush1.bf16.msra.mxu0 0
        %512 = vmatprep.subr.bf16.mxu0 0
        %513 = vmatpush1.bf16.msra.mxu0 0
        %514 = vmatprep.subr.bf16.mxu0 0
        %515 = vmatpush1.bf16.msra.mxu0 0
        %516 = vmatprep.subr.bf16.mxu0 0
        %517 = vmatpush1.bf16.msra.mxu0 0
        %518 = vmatprep.subr.bf16.mxu0 0
        %519 = vmatpush1.bf16.msra.mxu0 0
        %520 = vmatprep.subr.bf16.mxu0 0
        %521 = vmatpush1.bf16.msra.mxu0 0
        %522 = vmatprep.subr.bf16.mxu0 0
        %523 = vmatpush1.bf16.msra.mxu0 0
        %524 = vmatprep.subr.bf16.mxu0 0
        %525 = vmatpush1.bf16.msra.mxu0 0
        %526 = vmatprep.subr.bf16.mxu0 0
        %527 = vmatpush1.bf16.msra.mxu0 0
        %528 = vmatprep.subr.bf16.mxu0 0
        %529 = vmatpush1.bf16.msra.mxu0 0
        %530 = vmatprep.mubr.bf16.mxu0 0
        %531 = vmatmul.mubr.bf16.gmra.mrb[0].mxu0 %v496
        %v532 = vpop.f32.mrb[0].mxu0
        %v533 = vadd.f32 0.0, %v532
        %v534 = vpop.f32.mrb[0].mxu0
        %v535 = vpop.f32.mrb[0].mxu0
        %v536 = vpop.f32.mrb[0].mxu0
        %537 = vdwg.mxu0
        %v540 = vunpack.c.l.b16 %v207
        %v541 = vunpack.c.l.b16 %v208
        %v542 = vpack.c.b16 %v541, %v540
        %v545 = vsel %vm249, %v193, 0
        %547 = vmatprep.subr.bf16.mxu0 0
        %548 = vmatpush1.bf16.msra.mxu0 %v542
        %549 = vmatprep.subr.bf16.mxu0 0
        %550 = vmatpush1.bf16.msra.mxu0 0
        %551 = vmatprep.subr.bf16.mxu0 0
        %552 = vmatpush1.bf16.msra.mxu0 0
        %553 = vmatprep.subr.bf16.mxu0 0
        %554 = vmatpush1.bf16.msra.mxu0 0
        %555 = vmatprep.subr.bf16.mxu0 0
        %556 = vmatpush1.bf16.msra.mxu0 0
        %557 = vmatprep.subr.bf16.mxu0 0
        %558 = vmatpush1.bf16.msra.mxu0 0
        %559 = vmatprep.subr.bf16.mxu0 0
        %560 = vmatpush1.bf16.msra.mxu0 0
        %561 = vmatprep.subr.bf16.mxu0 0
        %562 = vmatpush1.bf16.msra.mxu0 0
        %563 = vmatprep.subr.bf16.mxu0 0
        %564 = vmatpush1.bf16.msra.mxu0 0
        %565 = vmatprep.subr.bf16.mxu0 0
        %566 = vmatpush1.bf16.msra.mxu0 0
        %567 = vmatprep.subr.bf16.mxu0 0
        %568 = vmatpush1.bf16.msra.mxu0 0
        %569 = vmatprep.subr.bf16.mxu0 0
        %570 = vmatpush1.bf16.msra.mxu0 0
        %571 = vmatprep.subr.bf16.mxu0 0
        %572 = vmatpush1.bf16.msra.mxu0 0
        %573 = vmatprep.subr.bf16.mxu0 0
        %574 = vmatpush1.bf16.msra.mxu0 0
        %575 = vmatprep.subr.bf16.mxu0 0
        %576 = vmatpush1.bf16.msra.mxu0 0
        %577 = vmatprep.subr.bf16.mxu0 0
        %578 = vmatpush1.bf16.msra.mxu0 0
        %579 = vmatprep.mubr.bf16.mxu0 0
        %580 = vmatmul.mubr.bf16.gmra.mrb[0].mxu0 %v545
        %v581 = vpop.f32.mrb[0].mxu0
        %v582 = vadd.f32 0.0, %v581
        %v583 = vpop.f32.mrb[0].mxu0
        %v584 = vpop.f32.mrb[0].mxu0
        %v585 = vpop.f32.mrb[0].mxu0
        %586 = vdwg.mxu0
        %v589 = vunpack.c.l.b16 %v209
        %v590 = vunpack.c.l.b16 %v210
        %v591 = vpack.c.b16 %v590, %v589
        %v594 = vsel %vm249, %v194, 0
        %596 = vmatprep.subr.bf16.mxu0 0
        %597 = vmatpush1.bf16.msra.mxu0 %v591
        %598 = vmatprep.subr.bf16.mxu0 0
        %599 = vmatpush1.bf16.msra.mxu0 0
        %600 = vmatprep.subr.bf16.mxu0 0
        %601 = vmatpush1.bf16.msra.mxu0 0
        %602 = vmatprep.subr.bf16.mxu0 0
        %603 = vmatpush1.bf16.msra.mxu0 0
        %604 = vmatprep.subr.bf16.mxu0 0
        %605 = vmatpush1.bf16.msra.mxu0 0
        %606 = vmatprep.subr.bf16.mxu0 0
        %607 = vmatpush1.bf16.msra.mxu0 0
        %608 = vmatprep.subr.bf16.mxu0 0
        %609 = vmatpush1.bf16.msra.mxu0 0
        %610 = vmatprep.subr.bf16.mxu0 0
        %611 = vmatpush1.bf16.msra.mxu0 0
        %612 = vmatprep.subr.bf16.mxu0 0
        %613 = vmatpush1.bf16.msra.mxu0 0
        %614 = vmatprep.subr.bf16.mxu0 0
        %615 = vmatpush1.bf16.msra.mxu0 0
        %616 = vmatprep.subr.bf16.mxu0 0
        %617 = vmatpush1.bf16.msra.mxu0 0
        %618 = vmatprep.subr.bf16.mxu0 0
        %619 = vmatpush1.bf16.msra.mxu0 0
        %620 = vmatprep.subr.bf16.mxu0 0
        %621 = vmatpush1.bf16.msra.mxu0 0
        %622 = vmatprep.subr.bf16.mxu0 0
        %623 = vmatpush1.bf16.msra.mxu0 0
        %624 = vmatprep.subr.bf16.mxu0 0
        %625 = vmatpush1.bf16.msra.mxu0 0
        %626 = vmatprep.subr.bf16.mxu0 0
        %627 = vmatpush1.bf16.msra.mxu0 0
        %628 = vmatprep.mubr.bf16.mxu0 0
        %629 = vmatmul.mubr.bf16.gmra.mrb[0].mxu0 %v594
        %v630 = vpop.f32.mrb[0].mxu0
        %v631 = vadd.f32 0.0, %v630
        %v632 = vpop.f32.mrb[0].mxu0
        %v633 = vpop.f32.mrb[0].mxu0
        %v634 = vpop.f32.mrb[0].mxu0
        %635 = vdwg.mxu0
        %v636 = vmax.f32 %v288, 0.0
        %v637 = vmax.f32 %v337, 0.0
        %v638 = vmax.f32 %v386, 0.0
        %v639 = vmax.f32 %v435, 0.0
        %v640 = vmax.f32 %v484, 0.0
        %v641 = vmax.f32 %v533, 0.0
        %v642 = vmax.f32 %v582, 0.0
        %v643 = vmax.f32 %v631, 0.0
        %v644 = vpack.c.bf16 %v636, %v636
        %v645 = vpack.c.bf16 %v637, %v637
        %v646 = vpack.c.bf16 %v638, %v638
        %v647 = vpack.c.bf16 %v639, %v639
        %v648 = vpack.c.bf16 %v640, %v640
        %v649 = vpack.c.bf16 %v641, %v641
        %v650 = vpack.c.bf16 %v642, %v642
        %v651 = vpack.c.bf16 %v643, %v643
        %v656 = vunpack.c.l.b16 %v211
        %v657 = vunpack.c.l.b16 %v212
        %v658 = vunpack.c.l.b16 %v213
        %v659 = vunpack.c.l.b16 %v214
        %v660 = vpack.c.b16 %v657, %v656
        %v661 = vpack.c.b16 %v659, %v658
        %vm664 = vcmask 261120
        %v666 = vsel %vm664, %v644, 0
        %668 = vmatprep.subr.bf16.mxu0 0
        %669 = vmatpush1.bf16.msra.mxu0 %v660
        %670 = vmatprep.subr.bf16.mxu0 0
        %671 = vmatpush1.bf16.msra.mxu0 %v661
        %672 = vmatprep.subr.bf16.mxu0 0
        %673 = vmatpush1.bf16.msra.mxu0 0
        %674 = vmatprep.subr.bf16.mxu0 0
        %675 = vmatpush1.bf16.msra.mxu0 0
        %676 = vmatprep.subr.bf16.mxu0 0
        %677 = vmatpush1.bf16.msra.mxu0 0
        %678 = vmatprep.subr.bf16.mxu0 0
        %679 = vmatpush1.bf16.msra.mxu0 0
        %680 = vmatprep.subr.bf16.mxu0 0
        %681 = vmatpush1.bf16.msra.mxu0 0
        %682 = vmatprep.subr.bf16.mxu0 0
        %683 = vmatpush1.bf16.msra.mxu0 0
        %684 = vmatprep.subr.bf16.mxu0 0
        %685 = vmatpush1.bf16.msra.mxu0 0
        %686 = vmatprep.subr.bf16.mxu0 0
        %687 = vmatpush1.bf16.msra.mxu0 0
        %688 = vmatprep.subr.bf16.mxu0 0
        %689 = vmatpush1.bf16.msra.mxu0 0
        %690 = vmatprep.subr.bf16.mxu0 0
        %691 = vmatpush1.bf16.msra.mxu0 0
        %692 = vmatprep.subr.bf16.mxu0 0
        %693 = vmatpush1.bf16.msra.mxu0 0
        %694 = vmatprep.subr.bf16.mxu0 0
        %695 = vmatpush1.bf16.msra.mxu0 0
        %696 = vmatprep.subr.bf16.mxu0 0
        %697 = vmatpush1.bf16.msra.mxu0 0
        %698 = vmatprep.subr.bf16.mxu0 0
        %699 = vmatpush1.bf16.msra.mxu0 0
        %700 = vmatprep.mubr.bf16.mxu0 0
        %701 = vmatmul.mubr.bf16.gmra.mrb[0].mxu0 %v666
        %v702 = vpop.f32.mrb[0].mxu0
        %v703 = vadd.f32 0.0, %v702
        %v704 = vpop.f32.mrb[0].mxu0
        %v705 = vpop.f32.mrb[0].mxu0
        %v706 = vpop.f32.mrb[0].mxu0
        %707 = vdwg.mxu0
        %v712 = vunpack.c.l.b16 %v215
        %v713 = vunpack.c.l.b16 %v216
        %v714 = vunpack.c.l.b16 %v217
        %v715 = vunpack.c.l.b16 %v218
        %v716 = vpack.c.b16 %v713, %v712
        %v717 = vpack.c.b16 %v715, %v714
        %v721 = vsel %vm664, %v645, 0
        %723 = vmatprep.subr.bf16.mxu0 0
        %724 = vmatpush1.bf16.msra.mxu0 %v716
        %725 = vmatprep.subr.bf16.mxu0 0
        %726 = vmatpush1.bf16.msra.mxu0 %v717
        %727 = vmatprep.subr.bf16.mxu0 0
        %728 = vmatpush1.bf16.msra.mxu0 0
        %729 = vmatprep.subr.bf16.mxu0 0
        %730 = vmatpush1.bf16.msra.mxu0 0
        %731 = vmatprep.subr.bf16.mxu0 0
        %732 = vmatpush1.bf16.msra.mxu0 0
        %733 = vmatprep.subr.bf16.mxu0 0
        %734 = vmatpush1.bf16.msra.mxu0 0
        %735 = vmatprep.subr.bf16.mxu0 0
        %736 = vmatpush1.bf16.msra.mxu0 0
        %737 = vmatprep.subr.bf16.mxu0 0
        %738 = vmatpush1.bf16.msra.mxu0 0
        %739 = vmatprep.subr.bf16.mxu0 0
        %740 = vmatpush1.bf16.msra.mxu0 0
        %741 = vmatprep.subr.bf16.mxu0 0
        %742 = vmatpush1.bf16.msra.mxu0 0
        %743 = vmatprep.subr.bf16.mxu0 0
        %744 = vmatpush1.bf16.msra.mxu0 0
        %745 = vmatprep.subr.bf16.mxu0 0
        %746 = vmatpush1.bf16.msra.mxu0 0
        %747 = vmatprep.subr.bf16.mxu0 0
        %748 = vmatpush1.bf16.msra.mxu0 0
        %749 = vmatprep.subr.bf16.mxu0 0
        %750 = vmatpush1.bf16.msra.mxu0 0
        %751 = vmatprep.subr.bf16.mxu0 0
        %752 = vmatpush1.bf16.msra.mxu0 0
        %753 = vmatprep.subr.bf16.mxu0 0
        %754 = vmatpush1.bf16.msra.mxu0 0
        %755 = vmatprep.mubr.bf16.mxu0 0
        %756 = vmatmul.mubr.bf16.gmra.mrb[0].mxu0 %v721
        %v757 = vpop.f32.mrb[0].mxu0
        %v758 = vadd.f32 0.0, %v757
        %v759 = vpop.f32.mrb[0].mxu0
        %v760 = vpop.f32.mrb[0].mxu0
        %v761 = vpop.f32.mrb[0].mxu0
        %762 = vdwg.mxu0
        %v767 = vunpack.c.l.b16 %v219
        %v768 = vunpack.c.l.b16 %v220
        %v769 = vunpack.c.l.b16 %v221
        %v770 = vunpack.c.l.b16 %v222
        %v771 = vpack.c.b16 %v768, %v767
        %v772 = vpack.c.b16 %v770, %v769
        %v776 = vsel %vm664, %v646, 0
        %778 = vmatprep.subr.bf16.mxu0 0
        %779 = vmatpush1.bf16.msra.mxu0 %v771
        %780 = vmatprep.subr.bf16.mxu0 0
        %781 = vmatpush1.bf16.msra.mxu0 %v772
        %782 = vmatprep.subr.bf16.mxu0 0
        %783 = vmatpush1.bf16.msra.mxu0 0
        %784 = vmatprep.subr.bf16.mxu0 0
        %785 = vmatpush1.bf16.msra.mxu0 0
        %786 = vmatprep.subr.bf16.mxu0 0
        %787 = vmatpush1.bf16.msra.mxu0 0
        %788 = vmatprep.subr.bf16.mxu0 0
        %789 = vmatpush1.bf16.msra.mxu0 0
        %790 = vmatprep.subr.bf16.mxu0 0
        %791 = vmatpush1.bf16.msra.mxu0 0
        %792 = vmatprep.subr.bf16.mxu0 0
        %793 = vmatpush1.bf16.msra.mxu0 0
        %794 = vmatprep.subr.bf16.mxu0 0
        %795 = vmatpush1.bf16.msra.mxu0 0
        %796 = vmatprep.subr.bf16.mxu0 0
        %797 = vmatpush1.bf16.msra.mxu0 0
        %798 = vmatprep.subr.bf16.mxu0 0
        %799 = vmatpush1.bf16.msra.mxu0 0
        %800 = vmatprep.subr.bf16.mxu0 0
        %801 = vmatpush1.bf16.msra.mxu0 0
        %802 = vmatprep.subr.bf16.mxu0 0
        %803 = vmatpush1.bf16.msra.mxu0 0
        %804 = vmatprep.subr.bf16.mxu0 0
        %805 = vmatpush1.bf16.msra.mxu0 0
        %806 = vmatprep.subr.bf16.mxu0 0
        %807 = vmatpush1.bf16.msra.mxu0 0
        %808 = vmatprep.subr.bf16.mxu0 0
        %809 = vmatpush1.bf16.msra.mxu0 0
        %810 = vmatprep.mubr.bf16.mxu0 0
        %811 = vmatmul.mubr.bf16.gmra.mrb[0].mxu0 %v776
        %v812 = vpop.f32.mrb[0].mxu0
        %v813 = vadd.f32 0.0, %v812
        %v814 = vpop.f32.mrb[0].mxu0
        %v815 = vpop.f32.mrb[0].mxu0
        %v816 = vpop.f32.mrb[0].mxu0
        %817 = vdwg.mxu0
        %v822 = vunpack.c.l.b16 %v223
        %v823 = vunpack.c.l.b16 %v224
        %v824 = vunpack.c.l.b16 %v225
        %v825 = vunpack.c.l.b16 %v226
        %v826 = vpack.c.b16 %v823, %v822
        %v827 = vpack.c.b16 %v825, %v824
        %v831 = vsel %vm664, %v647, 0
        %833 = vmatprep.subr.bf16.mxu0 0
        %834 = vmatpush1.bf16.msra.mxu0 %v826
        %835 = vmatprep.subr.bf16.mxu0 0
        %836 = vmatpush1.bf16.msra.mxu0 %v827
        %837 = vmatprep.subr.bf16.mxu0 0
        %838 = vmatpush1.bf16.msra.mxu0 0
        %839 = vmatprep.subr.bf16.mxu0 0
        %840 = vmatpush1.bf16.msra.mxu0 0
        %841 = vmatprep.subr.bf16.mxu0 0
        %842 = vmatpush1.bf16.msra.mxu0 0
        %843 = vmatprep.subr.bf16.mxu0 0
        %844 = vmatpush1.bf16.msra.mxu0 0
        %845 = vmatprep.subr.bf16.mxu0 0
        %846 = vmatpush1.bf16.msra.mxu0 0
        %847 = vmatprep.subr.bf16.mxu0 0
        %848 = vmatpush1.bf16.msra.mxu0 0
        %849 = vmatprep.subr.bf16.mxu0 0
        %850 = vmatpush1.bf16.msra.mxu0 0
        %851 = vmatprep.subr.bf16.mxu0 0
        %852 = vmatpush1.bf16.msra.mxu0 0
        %853 = vmatprep.subr.bf16.mxu0 0
        %854 = vmatpush1.bf16.msra.mxu0 0
        %855 = vmatprep.subr.bf16.mxu0 0
        %856 = vmatpush1.bf16.msra.mxu0 0
        %857 = vmatprep.subr.bf16.mxu0 0
        %858 = vmatpush1.bf16.msra.mxu0 0
        %859 = vmatprep.subr.bf16.mxu0 0
        %860 = vmatpush1.bf16.msra.mxu0 0
        %861 = vmatprep.subr.bf16.mxu0 0
        %862 = vmatpush1.bf16.msra.mxu0 0
        %863 = vmatprep.subr.bf16.mxu0 0
        %864 = vmatpush1.bf16.msra.mxu0 0
        %865 = vmatprep.mubr.bf16.mxu0 0
        %866 = vmatmul.mubr.bf16.gmra.mrb[0].mxu0 %v831
        %v867 = vpop.f32.mrb[0].mxu0
        %v868 = vadd.f32 0.0, %v867
        %v869 = vpop.f32.mrb[0].mxu0
        %v870 = vpop.f32.mrb[0].mxu0
        %v871 = vpop.f32.mrb[0].mxu0
        %872 = vdwg.mxu0
        %v877 = vunpack.c.l.b16 %v227
        %v878 = vunpack.c.l.b16 %v228
        %v879 = vunpack.c.l.b16 %v229
        %v880 = vunpack.c.l.b16 %v230
        %v881 = vpack.c.b16 %v878, %v877
        %v882 = vpack.c.b16 %v880, %v879
        %v886 = vsel %vm664, %v648, 0
        %888 = vmatprep.subr.bf16.mxu0 0
        %889 = vmatpush1.bf16.msra.mxu0 %v881
        %890 = vmatprep.subr.bf16.mxu0 0
        %891 = vmatpush1.bf16.msra.mxu0 %v882
        %892 = vmatprep.subr.bf16.mxu0 0
        %893 = vmatpush1.bf16.msra.mxu0 0
        %894 = vmatprep.subr.bf16.mxu0 0
        %895 = vmatpush1.bf16.msra.mxu0 0
        %896 = vmatprep.subr.bf16.mxu0 0
        %897 = vmatpush1.bf16.msra.mxu0 0
        %898 = vmatprep.subr.bf16.mxu0 0
        %899 = vmatpush1.bf16.msra.mxu0 0
        %900 = vmatprep.subr.bf16.mxu0 0
        %901 = vmatpush1.bf16.msra.mxu0 0
        %902 = vmatprep.subr.bf16.mxu0 0
        %903 = vmatpush1.bf16.msra.mxu0 0
        %904 = vmatprep.subr.bf16.mxu0 0
        %905 = vmatpush1.bf16.msra.mxu0 0
        %906 = vmatprep.subr.bf16.mxu0 0
        %907 = vmatpush1.bf16.msra.mxu0 0
        %908 = vmatprep.subr.bf16.mxu0 0
        %909 = vmatpush1.bf16.msra.mxu0 0
        %910 = vmatprep.subr.bf16.mxu0 0
        %911 = vmatpush1.bf16.msra.mxu0 0
        %912 = vmatprep.subr.bf16.mxu0 0
        %913 = vmatpush1.bf16.msra.mxu0 0
        %914 = vmatprep.subr.bf16.mxu0 0
        %915 = vmatpush1.bf16.msra.mxu0 0
        %916 = vmatprep.subr.bf16.mxu0 0
        %917 = vmatpush1.bf16.msra.mxu0 0
        %918 = vmatprep.subr.bf16.mxu0 0
        %919 = vmatpush1.bf16.msra.mxu0 0
        %920 = vmatprep.mubr.bf16.mxu0 0
        %921 = vmatmul.mubr.bf16.gmra.mrb[0].mxu0 %v886
        %v922 = vpop.f32.mrb[0].mxu0
        %v923 = vadd.f32 0.0, %v922
        %v924 = vpop.f32.mrb[0].mxu0
        %v925 = vpop.f32.mrb[0].mxu0
        %v926 = vpop.f32.mrb[0].mxu0
        %927 = vdwg.mxu0
        %v932 = vunpack.c.l.b16 %v231
        %v933 = vunpack.c.l.b16 %v232
        %v934 = vunpack.c.l.b16 %v233
        %v935 = vunpack.c.l.b16 %v234
        %v936 = vpack.c.b16 %v933, %v932
        %v937 = vpack.c.b16 %v935, %v934
        %v941 = vsel %vm664, %v649, 0
        %943 = vmatprep.subr.bf16.mxu0 0
        %944 = vmatpush1.bf16.msra.mxu0 %v936
        %945 = vmatprep.subr.bf16.mxu0 0
        %946 = vmatpush1.bf16.msra.mxu0 %v937
        %947 = vmatprep.subr.bf16.mxu0 0
        %948 = vmatpush1.bf16.msra.mxu0 0
        %949 = vmatprep.subr.bf16.mxu0 0
        %950 = vmatpush1.bf16.msra.mxu0 0
        %951 = vmatprep.subr.bf16.mxu0 0
        %952 = vmatpush1.bf16.msra.mxu0 0
        %953 = vmatprep.subr.bf16.mxu0 0
        %954 = vmatpush1.bf16.msra.mxu0 0
        %955 = vmatprep.subr.bf16.mxu0 0
        %956 = vmatpush1.bf16.msra.mxu0 0
        %957 = vmatprep.subr.bf16.mxu0 0
        %958 = vmatpush1.bf16.msra.mxu0 0
        %959 = vmatprep.subr.bf16.mxu0 0
        %960 = vmatpush1.bf16.msra.mxu0 0
        %961 = vmatprep.subr.bf16.mxu0 0
        %962 = vmatpush1.bf16.msra.mxu0 0
        %963 = vmatprep.subr.bf16.mxu0 0
        %964 = vmatpush1.bf16.msra.mxu0 0
        %965 = vmatprep.subr.bf16.mxu0 0
        %966 = vmatpush1.bf16.msra.mxu0 0
        %967 = vmatprep.subr.bf16.mxu0 0
        %968 = vmatpush1.bf16.msra.mxu0 0
        %969 = vmatprep.subr.bf16.mxu0 0
        %970 = vmatpush1.bf16.msra.mxu0 0
        %971 = vmatprep.subr.bf16.mxu0 0
        %972 = vmatpush1.bf16.msra.mxu0 0
        %973 = vmatprep.subr.bf16.mxu0 0
        %974 = vmatpush1.bf16.msra.mxu0 0
        %975 = vmatprep.mubr.bf16.mxu0 0
        %976 = vmatmul.mubr.bf16.gmra.mrb[0].mxu0 %v941
        %v977 = vpop.f32.mrb[0].mxu0
        %v978 = vadd.f32 0.0, %v977
        %v979 = vpop.f32.mrb[0].mxu0
        %v980 = vpop.f32.mrb[0].mxu0
        %v981 = vpop.f32.mrb[0].mxu0
        %982 = vdwg.mxu0
        %v987 = vunpack.c.l.b16 %v235
        %v988 = vunpack.c.l.b16 %v236
        %v989 = vunpack.c.l.b16 %v237
        %v990 = vunpack.c.l.b16 %v238
        %v991 = vpack.c.b16 %v988, %v987
        %v992 = vpack.c.b16 %v990, %v989
        %v996 = vsel %vm664, %v650, 0
        %998 = vmatprep.subr.bf16.mxu0 0
        %999 = vmatpush1.bf16.msra.mxu0 %v991
        %1000 = vmatprep.subr.bf16.mxu0 0
        %1001 = vmatpush1.bf16.msra.mxu0 %v992
        %1002 = vmatprep.subr.bf16.mxu0 0
        %1003 = vmatpush1.bf16.msra.mxu0 0
        %1004 = vmatprep.subr.bf16.mxu0 0
        %1005 = vmatpush1.bf16.msra.mxu0 0
        %1006 = vmatprep.subr.bf16.mxu0 0
        %1007 = vmatpush1.bf16.msra.mxu0 0
        %1008 = vmatprep.subr.bf16.mxu0 0
        %1009 = vmatpush1.bf16.msra.mxu0 0
        %1010 = vmatprep.subr.bf16.mxu0 0
        %1011 = vmatpush1.bf16.msra.mxu0 0
        %1012 = vmatprep.subr.bf16.mxu0 0
        %1013 = vmatpush1.bf16.msra.mxu0 0
        %1014 = vmatprep.subr.bf16.mxu0 0
        %1015 = vmatpush1.bf16.msra.mxu0 0
        %1016 = vmatprep.subr.bf16.mxu0 0
        %1017 = vmatpush1.bf16.msra.mxu0 0
        %1018 = vmatprep.subr.bf16.mxu0 0
        %1019 = vmatpush1.bf16.msra.mxu0 0
        %1020 = vmatprep.subr.bf16.mxu0 0
        %1021 = vmatpush1.bf16.msra.mxu0 0
        %1022 = vmatprep.subr.bf16.mxu0 0
        %1023 = vmatpush1.bf16.msra.mxu0 0
        %1024 = vmatprep.subr.bf16.mxu0 0
        %1025 = vmatpush1.bf16.msra.mxu0 0
        %1026 = vmatprep.subr.bf16.mxu0 0
        %1027 = vmatpush1.bf16.msra.mxu0 0
        %1028 = vmatprep.subr.bf16.mxu0 0
        %1029 = vmatpush1.bf16.msra.mxu0 0
        %1030 = vmatprep.mubr.bf16.mxu0 0
        %1031 = vmatmul.mubr.bf16.gmra.mrb[0].mxu0 %v996
        %v1032 = vpop.f32.mrb[0].mxu0
        %v1033 = vadd.f32 0.0, %v1032
        %v1034 = vpop.f32.mrb[0].mxu0
        %v1035 = vpop.f32.mrb[0].mxu0
        %v1036 = vpop.f32.mrb[0].mxu0
        %1037 = vdwg.mxu0
        %v1042 = vunpack.c.l.b16 %v239
        %v1043 = vunpack.c.l.b16 %v240
        %v1044 = vunpack.c.l.b16 %v241
        %v1045 = vunpack.c.l.b16 %v242
        %v1046 = vpack.c.b16 %v1043, %v1042
        %v1047 = vpack.c.b16 %v1045, %v1044
        %v1051 = vsel %vm664, %v651, 0
        %1053 = vmatprep.subr.bf16.mxu0 0
        %1054 = vmatpush1.bf16.msra.mxu0 %v1046
        %1055 = vmatprep.subr.bf16.mxu0 0
        %1056 = vmatpush1.bf16.msra.mxu0 %v1047
        %1057 = vmatprep.subr.bf16.mxu0 0
        %1058 = vmatpush1.bf16.msra.mxu0 0
        %1059 = vmatprep.subr.bf16.mxu0 0
        %1060 = vmatpush1.bf16.msra.mxu0 0
        %1061 = vmatprep.subr.bf16.mxu0 0
        %1062 = vmatpush1.bf16.msra.mxu0 0
        %1063 = vmatprep.subr.bf16.mxu0 0
        %1064 = vmatpush1.bf16.msra.mxu0 0
        %1065 = vmatprep.subr.bf16.mxu0 0
        %1066 = vmatpush1.bf16.msra.mxu0 0
        %1067 = vmatprep.subr.bf16.mxu0 0
        %1068 = vmatpush1.bf16.msra.mxu0 0
        %1069 = vmatprep.subr.bf16.mxu0 0
        %1070 = vmatpush1.bf16.msra.mxu0 0
        %1071 = vmatprep.subr.bf16.mxu0 0
        %1072 = vmatpush1.bf16.msra.mxu0 0
        %1073 = vmatprep.subr.bf16.mxu0 0
        %1074 = vmatpush1.bf16.msra.mxu0 0
        %1075 = vmatprep.subr.bf16.mxu0 0
        %1076 = vmatpush1.bf16.msra.mxu0 0
        %1077 = vmatprep.subr.bf16.mxu0 0
        %1078 = vmatpush1.bf16.msra.mxu0 0
        %1079 = vmatprep.subr.bf16.mxu0 0
        %1080 = vmatpush1.bf16.msra.mxu0 0
        %1081 = vmatprep.subr.bf16.mxu0 0
        %1082 = vmatpush1.bf16.msra.mxu0 0
        %1083 = vmatprep.subr.bf16.mxu0 0
        %1084 = vmatpush1.bf16.msra.mxu0 0
        %1085 = vmatprep.mubr.bf16.mxu0 0
        %1086 = vmatmul.mubr.bf16.gmra.mrb[0].mxu0 %v1051
        %v1087 = vpop.f32.mrb[0].mxu0
        %v1088 = vadd.f32 0.0, %v1087
        %v1089 = vpop.f32.mrb[0].mxu0
        %v1090 = vpop.f32.mrb[0].mxu0
        %v1091 = vpop.f32.mrb[0].mxu0
        %1092 = vdwg.mxu0
        %v1093 = vmax.f32 %v703, 0.0
        %v1094 = vmax.f32 %v758, 0.0
        %v1095 = vmax.f32 %v813, 0.0
        %v1096 = vmax.f32 %v868, 0.0
        %v1097 = vmax.f32 %v923, 0.0
        %v1098 = vmax.f32 %v978, 0.0
        %v1099 = vmax.f32 %v1033, 0.0
        %v1100 = vmax.f32 %v1088, 0.0
        %v1102 = vrot.slane %v1094, 7
        %v1105 = vrot.slane %v1095, 6
        %v1108 = vrot.slane %v1096, 5
        %v1111 = vrot.slane %v1097, 4
        %v1114 = vrot.slane %v1098, 3
        %v1117 = vrot.slane %v1099, 2
        %v1120 = vrot.slane %v1100, 1
        %vm1122 = vcmask 1040384
        %v1123 = vsel %vm1122, %v1093, %v1102
        %vm1124 = vcmask 1041408
        %v1125 = vsel %vm1124, %v1123, %v1105
        %vm1126 = vcmask 1042432
        %v1127 = vsel %vm1126, %v1125, %v1108
        %vm1128 = vcmask 1043456
        %v1129 = vsel %vm1128, %v1127, %v1111
        %vm1130 = vcmask 1044480
        %v1131 = vsel %vm1130, %v1129, %v1114
        %vm1132 = vcmask 1045504
        %v1133 = vsel %vm1132, %v1131, %v1117
        %vm1134 = vcmask 1046528
        %v1135 = vsel %vm1134, %v1133, %v1120
        %1136 = vst [vmem:[%s185] sm:$0xff] %v1135
        %p1137 = scmp.lt.s32.totalorder %s16, 1
        %s1138 = scalar_select %p1137, %s16, 1
        %s1139 = smul.addr %s1138, 8
        %s1140 = scalar_lea.vmem %s2, %s1139
        // Predicated region
        $region33: #{phenotype_forward_batched.1} parent=27 // pred_check
          %p1141 = pneg %p86
        $region34: #{phenotype_forward_batched.1} parent=27 // pred_check_branch
          %1143 = sbr.rel (%p1141) target = $region36
        $region35: #{phenotype_forward_batched.1} parent=27 // pred_region
          _
        $region36: #{phenotype_forward_batched.1} parent=27 // pred_fallthru
          _
      $region28: #{phenotype_forward_batched.1} parent=5 // pred_fallthru
        _
      %p1144 = scmp.le.s32.totalorder 2, %s11
      // Predicated region
      $region37: #{phenotype_forward_batched.1} parent=5 // pred_check
        %p1145 = pneg %p1144
      $region38: #{phenotype_forward_batched.1} parent=5 // pred_check_branch
        %1147 = sbr.rel (%p1145) target = $region40
      $region39: #{phenotype_forward_batched.1} parent=5 // pred_region
        %s1148 = ssub.s32 %s11, 2
        // Predicated region
        $region41: #{phenotype_forward_batched.1} parent=39 // pred_check
          %p1149 = pneg %p92
        $region42: #{phenotype_forward_batched.1} parent=39 // pred_check_branch
          %1151 = sbr.rel (%p1149) target = $region44
        $region43: #{phenotype_forward_batched.1} parent=39 // pred_region
          %p1152 = scmp.lt.s32.totalorder %s17, 1
          %s1153 = scalar_select %p1152, %s17, 1
          %s1154 = smul.addr %s1153, 8
          %s1155 = scalar_lea.vmem %s2, %s1154
        $region44: #{phenotype_forward_batched.1} parent=39 // pred_fallthru
          _
      $region40: #{phenotype_forward_batched.1} parent=5 // pred_fallthru
        _
    $region6: #{phenotype_forward_batched.1} parent=1 // loop_footer
      %s15 = sadd.s32 1, %s11
    $region7: #{phenotype_forward_batched.1} parent=1 // loop_footer_branch
      %10 = sbr.rel target = $region3
    $region8: #{phenotype_forward_batched.1} parent=1 // loop_exit
      _
    %1156 = vsyncpa [#allocation3], 1
    %s1157 = scalar_lea.sflag [#allocation3], 1
    %1158 = vsyncpa %s1157, 1

</llo_original>
